<compile_context>
chip_gen: v5e
topology: v5e:2x2
jax: 0.10.0
libtpu: 0.0.40
codegen_flags: <defaults>
</compile_context>

<pallas_src>
import functools
import re

import jax
import jax.numpy as jnp
from jax import lax
from jax.experimental import pallas as pl
from jax.experimental.pallas import tpu as pltpu


_VMEM_BLOCK_CAP_BYTES = 8 << 20  # hard cap for a single sublane-group of rows


def _round_up(n: int, m: int) -> int:
    return ((n + m - 1) // m) * m


def _tpu_generation_and_cores():
    """Best-effort (tpu_generation, tensorcores_per_device).

    Conservative fallback (gen=0, cores=1) keeps every decision safe:
    f32 compute, 2 MiB tiles, no forced grid split.
    """
    gen, cores = 0, 1
    try:
        kind = jax.devices()[0].device_kind.lower()
    except Exception:
        return gen, cores
    m = re.search(r"v(\d+)", kind)
    if m:
        gen = int(m.group(1))
    # Devices exposing 2 TensorCores behind one jax device: v4 / v5p
    # (megacore) and v7x.  v5e ("v5 lite") and v6e are single-TC.
    if gen >= 7 or gen == 4 or (gen == 5 and "lite" not in kind and "5e" not in kind):
        cores = 2
    return gen, cores


# ---------------------------------------------------------------------------
# Activation math (traced inside the kernel body -> runs on VPU / EUP)
# ---------------------------------------------------------------------------
def _apply_activation(x, hidden_act: str):
    act = hidden_act.lower()
    if act == "leakyrelu":
        # torch.nn.functional.leaky_relu default negative_slope = 0.01
        return jnp.where(x >= 0, x, 0.01 * x)
    elif act == "relu":
        return jnp.maximum(x, 0.0)
    elif act == "gelu":
        # exact (erf-based) gelu, matching transformers' get_activation("gelu").
        # Always evaluated in f32 (erf lowers to a VALU polynomial; keep the
        # extra mantissa for PyTorch-level accuracy).
        # TODO(synk): on v7x a bf16 erf polynomial would halve VALU width and
        # keep the kernel HBM-bound; left in f32 to preserve exact numerics.
        xf = x.astype(jnp.float32)
        return 0.5 * xf * (1.0 + lax.erf(xf * 0.7071067811865476))
    elif act in ("gelu_new", "gelu_tanh"):
        c = 0.7978845608028654  # sqrt(2/pi)
        return 0.5 * x * (1.0 + jnp.tanh(c * (x + 0.044715 * x * x * x)))
    elif act in ("silu", "swish"):
        return x * jax.nn.sigmoid(x)
    elif act == "tanh":
        return jnp.tanh(x)
    elif act == "sigmoid":
        return jax.nn.sigmoid(x)
    else:
        raise ValueError(f"Unsupported hidden_act: {hidden_act}")


# ---------------------------------------------------------------------------
# Pallas kernel: elementwise activation on a [block_rows, lanes] VMEM block
# ---------------------------------------------------------------------------
def _activation_kernel(x_ref, o_ref, *, hidden_act: str, compute_dtype):
    x = x_ref[...].astype(compute_dtype)
    o_ref[...] = _apply_activation(x, hidden_act).astype(o_ref.dtype)


def activation_pallas(x, hidden_act: str = "gelu", *, target_block_bytes=None):
    """Apply `hidden_act` elementwise to `x` using a Pallas TPU kernel."""
    orig_shape = x.shape
    total = int(x.size)
    if total == 0:
        return x

    gen, num_cores = _tpu_generation_and_cores()
    itemsize = jnp.dtype(x.dtype).itemsize
    # Sublane packing multiple: 8 rows for 32-bit, 16 for 16-bit, 32 for 8-bit.
    sub = {4: 8, 2: 16, 1: 32}.get(itemsize, 8)
    if target_block_bytes is None:
        # ~2 MiB blocks on v5e (+unknown), ~4 MiB on v6e / v7x.
        target_block_bytes = (4 << 20) if gen >= 6 else (2 << 20)

    # ---- copy-free 2-D view [rows, lanes] (no pad, no slice) ---------------
    flat = x.reshape(-1)                      # free for contiguous arrays
    if total % 128 == 0:
        # lane-dense view: unmasked full-lane stores regardless of orig shape.
        lanes = 512 if total % 512 == 0 else (256 if total % 256 == 0 else 128)
    else:
        # Ragged total: keep the original trailing dim as the lane dim
        # (full-extent last block dim is always legal).  Masked stores, but
        # zero extra HBM traffic.
        lanes = orig_shape[-1] if len(orig_shape) >= 1 else 1
    lanes_vmem = _round_up(lanes, 128)        # VMEM rounds the lane dim to 128
    if sub * lanes_vmem * itemsize > _VMEM_BLOCK_CAP_BYTES:
        # TODO(synk): a single ragged row group would blow VMEM; rare fallback
        # to the padded lane-dense path (pays one pad + one slice copy).
        padded = _round_up(total, 512)
        out = activation_pallas(jnp.pad(flat, (0, padded - total)), hidden_act,
                                target_block_bytes=target_block_bytes)
        return out[:total].reshape(orig_shape)

    rows = total // lanes
    view = flat.reshape(rows, lanes)          # free

    # ---- row tiling ---------------------------------------------------------
    block_rows = max(sub, (target_block_bytes // (lanes_vmem * itemsize)) // sub * sub)
    if block_rows >= rows:
        block_rows = rows                     # single block (full-extent dim)
    nsteps = pl.cdiv(rows, block_rows)

    # 2-TensorCore chips only: round small step counts up to a multiple of the
    # core count so the "parallel" grid axis gives both cores equal work.
    # Single-TC chips (v5e / v6e) keep the minimal step count.
    if (num_cores > 1 and nsteps % num_cores != 0
            and nsteps <= 8 * num_cores and rows >= num_cores * sub):
        want = _round_up(max(nsteps, num_cores), num_cores)
        cand = max(sub, _round_up(pl.cdiv(rows, want), sub))
        if cand < rows and pl.cdiv(rows, cand) == want:
            block_rows, nsteps = cand, want

    # ---- compute dtype ------------------------------------------------------
    # v6e / v7x: native bf16 VALU + EUP -> compute bf16 in, bf16 out (fewer
    # casts, half the vreg pressure).  v5e / unknown: upcast to f32.
    if x.dtype == jnp.bfloat16 and gen >= 6:
        compute_dtype = jnp.bfloat16
    else:
        compute_dtype = jnp.float32

    def _run(cdt):
        kernel = functools.partial(_activation_kernel, hidden_act=hidden_act,
                                   compute_dtype=cdt)
        return pl.pallas_call(
            kernel,
            out_shape=jax.ShapeDtypeStruct((rows, lanes), x.dtype),
            grid_spec=pltpu.PrefetchScalarGridSpec(
                num_scalar_prefetch=0,
                grid=(nsteps,),
                in_specs=[pl.BlockSpec((block_rows, lanes), lambda i: (i, 0))],
                out_specs=pl.BlockSpec((block_rows, lanes), lambda i: (i, 0)),
            ),
            compiler_params=pltpu.CompilerParams(
                dimension_semantics=("parallel",),
                vmem_limit_bytes=(32 << 20) if gen >= 6 else None,
            ),
        )(view)

    try:
        out2d = _run(compute_dtype)
    except Exception:
        if compute_dtype == jnp.float32:
            raise
        out2d = _run(jnp.float32)   # safety net if a bf16 op lacks a lowering

    return out2d.reshape(orig_shape)   # free; no slicing needed


# ---------------------------------------------------------------------------
# Pure-JAX reference for correctness checking (f32-internal compute)
# ---------------------------------------------------------------------------
def activation_ref(x, hidden_act: str = "gelu"):
    return _apply_activation(x.astype(jnp.float32), hidden_act).astype(x.dtype)


if __name__ == "__main__":
    ok = True

    def _check(tag, x, act, atol=1e-5, rtol=1e-5, **kwargs):
        out = jax.block_until_ready(activation_pallas(x, hidden_act=act, **kwargs))
        ref = activation_ref(x, hidden_act=act)
        good = (out.shape == x.shape) and bool(
            jnp.allclose(out.astype(jnp.float32), ref.astype(jnp.float32),
                         atol=atol, rtol=rtol))
        if not good:
            print(f"MISMATCH: {tag} ({act})")
        return good

    # Small shape implied by the adapter forward: [batch, seq, hidden]
    x_small = jax.random.normal(jax.random.PRNGKey(0), (2, 8, 32), dtype=jnp.float32)
    for act in ("gelu", "relu", "leakyrelu", "silu", "tanh"):
        ok &= _check("small f32", x_small, act)

    # Moderate shape: lane-dense branch, still cheap.
    x_mid = jax.random.normal(jax.random.PRNGKey(1), (4, 128, 768), dtype=jnp.float32)
    ok &= _check("mid f32", x_mid, "gelu")

    # Ragged total (not a multiple of 128): copy-free full-trailing-dim branch.
    x_ragged = jax.random.normal(jax.random.PRNGKey(2), (3, 7, 33), dtype=jnp.float32)
    ok &= _check("ragged f32", x_ragged, "silu")

    # Multi-step grid with a partial (masked) last block, forced via tiny tiles.
    x_part = jax.random.normal(jax.random.PRNGKey(4), (20, 512), dtype=jnp.float32)
    ok &= _check("partial-block f32", x_part, "gelu", target_block_bytes=16 * 1024)

    # bf16 path (native bf16 compute on v6e/v7x, f32 upcast elsewhere).
    x_bf16 = jax.random.normal(jax.random.PRNGKey(3), (2, 8, 32)).astype(jnp.bfloat16)
    ok &= _check("small bf16", x_bf16, "silu", atol=2e-2, rtol=2e-2)

    if ok:
        print("KERNEL_OK")
</pallas_src>

<mosaic_0001>
module attributes {stable_mosaic.version = 11 : i64} {
  func.func @_activation_kernel(%arg0: i32, %arg1: memref<1x512xf32, #tpu.memory_space<vmem>>, %arg2: memref<1x512xf32, #tpu.memory_space<vmem>>) attributes {dimension_semantics = [#tpu.dimension_semantics<parallel>], iteration_bounds = array<i64: 1>, scalar_prefetch = 0 : i64, scratch_operands = 0 : i64, tpu.core_type = #tpu.core_type<tc>, window_params = [{transform_indices = @transform_0, window_bounds = array<i64: 1, 512>}, {transform_indices = @transform_1, window_bounds = array<i64: 1, 512>}]} {
    %c0 = arith.constant 0 : index
    %c0_0 = arith.constant 0 : index
    %0 = vector.load %arg1[%c0, %c0_0] : memref<1x512xf32, #tpu.memory_space<vmem>>, vector<1x512xf32>
    %cst = arith.constant 5.000000e-01 : f32
    %1 = vector.broadcast %cst : f32 to vector<1x512xf32>
    %2 = arith.mulf %1, %0 : vector<1x512xf32>
    %cst_1 = arith.constant 0.707106769 : f32
    %3 = vector.broadcast %cst_1 : f32 to vector<1x512xf32>
    %4 = arith.mulf %0, %3 : vector<1x512xf32>
    %5 = math.erf %4 : vector<1x512xf32>
    %cst_2 = arith.constant 1.000000e+00 : f32
    %6 = vector.broadcast %cst_2 : f32 to vector<1x512xf32>
    %7 = arith.addf %6, %5 : vector<1x512xf32>
    %8 = arith.mulf %2, %7 : vector<1x512xf32>
    %c0_3 = arith.constant 0 : index
    %c0_4 = arith.constant 0 : index
    %9 = vector.load %arg2[%c0_3, %c0_4] : memref<1x512xf32, #tpu.memory_space<vmem>>, vector<1x512xf32>
    tpu.vector_store %arg2[%c0_3, %c0_4], %8 {strides = array<i32>} : memref<1x512xf32, #tpu.memory_space<vmem>>, vector<1x512xf32>,
    return
  }
  func.func @transform_0(%arg0: i32) -> (i32, i32) {
    %c0_i32 = arith.constant 0 : i32
    %c0_i32_0 = arith.constant 0 : i32
    return %arg0, %c0_i32 : i32, i32
  }
  func.func @transform_1(%arg0: i32) -> (i32, i32) {
    %c0_i32 = arith.constant 0 : i32
    %c0_i32_0 = arith.constant 0 : i32
    return %arg0, %c0_i32 : i32, i32
  }
}

</mosaic_0001>

<llo_original>
// kernel: tpu_custom_call.1
$region0: #{tpu_custom_call.1}
  #allocation0 [shape = 'u32[]', space=smem, size = 0x4, offset = 0x4, fixed_abs, tag = 'smem constant byte address 0x4 - core index']
  #allocation1 [shape = 'u32[72,128]{1,0:T(1,128)}', space=vmem, size = 0x9000, scoped, tag = 'internal scratch']
  %s0 = inlined_call_operand.hbm [shape: f32[1,512], index: 0, kind: input, shape index: {}]
  %s1 = inlined_call_operand.hbm [shape: f32[1,512], index: 1, kind: output, shape index: {}]
  %s2 = sld [smem:[#allocation0]]
  $region18: #{tpu_custom_call.1} parent=0
    _
  %s4 = ssub.s32 1, %s2
  %s5 = scalar_select 0, %s4, %s2
  $region1: #{tpu_custom_call.1} parent=0
    #allocation2 [shape = 'u8[2048]{0}', space=vmem, size = 0x800, scoped, tag = 'input window, operand 0, single buffered']
    #allocation3 [shape = 's32[1]{0}', space=sflag, size = 0x4, scoped, tag = 'scoped memory for tpu_custom_call.1']
    #allocation4 [shape = 's32[1]{0}', space=sflag, size = 0x4, scoped, tag = 'scoped memory for tpu_custom_call.1']
    #allocation5 [shape = 'u8[2048]{0}', space=vmem, size = 0x800, scoped, tag = 'output window, operand 0, single buffered']
    %6 = vsyncpa [#allocation3], 0
    %7 = vsyncpa [#allocation4], 0
    // Predicated region
    $region2: #{tpu_custom_call.1} parent=1 // pred_check
      _
    $region3: #{tpu_custom_call.1} parent=1 // pred_check_branch
      %9 = sbr.rel (0) target = $region5
    $region4: #{tpu_custom_call.1} parent=1 // pred_region
      %11 = vsyncadd [#allocation3], 0
      %s13 = sshll.u32 %s0, 4
      %s14 = int_to_ptr.hbm [resolvable:$true] %s13
      %s15 = sshll.u32 [#allocation2], 4
      %s16 = int_to_ptr.vmem [resolvable:$true] %s15
      %18 = dma.hbm_to_vmem [thread:$0]  %s14, 64, %s16, [#allocation3]
    $region5: #{tpu_custom_call.1} parent=1 // pred_fallthru
      _
    // Predicated region
    $region6: #{tpu_custom_call.1} parent=1 // pred_check
      _
    $region7: #{tpu_custom_call.1} parent=1 // pred_check_branch
      %20 = sbr.rel (0) target = $region9
    $region8: #{tpu_custom_call.1} parent=1 // pred_region
      %22 = dma.done [#allocation3], 64
    $region9: #{tpu_custom_call.1} parent=1 // pred_fallthru
      _
    %v23 = vld [vmem:[#allocation2] sm:$0xf]
    %v24 = vmul.f32 %v23, 0.5
    %v25 = vmul.f32 %v23, 0.70710677
    %v26 = vmul.f32 %v25, %v25
    %v27 = vmin.f32 16.0, %v26
    %v28 = vmul.f32 %v27, 2.1237322e-06
    %v29 = vadd.f32 %v28, 0.00028619796
    %v30 = vmul.f32 %v27, %v29
    %v31 = vadd.f32 %v30, 0.0036580483
    %v32 = vmul.f32 %v27, %v31
    %v33 = vadd.f32 %v32, 0.05243302
    %v34 = vmul.f32 %v27, %v33
    %v35 = vadd.f32 %v34, 0.18741608
    %v36 = vmul.f32 %v27, %v35
    %v37 = vadd.f32 %v36, 1.1283791
    %v38 = vmul.f32 %v25, %v37
    %v39 = vmul.f32 %v27, 3.8918573e-05
    %v40 = vadd.f32 %v39, 0.001143296
    %v41 = vmul.f32 %v27, %v40
    %v42 = vadd.f32 %v41, 0.014752088
    %v43 = vmul.f32 %v27, %v42
    %v44 = vadd.f32 %v43, 0.112945676
    %v45 = vmul.f32 %v27, %v44
    %v46 = vadd.f32 %v45, 0.4994258
    %v47 = vmul.f32 %v27, %v46
    %v48 = vadd.f32 %v47, 1.0
    %v49 = vrcp.pop %v48
    %v50 = vmul.f32 %v48, %v49
    %v51 = vsub.f32 1.0, %v50
    %v52 = vmul.f32 %v49, %v51
    %v53 = vadd.f32 %v49, %v52
    %vm54 = vweird.f32 %v48
    %vm55 = vweird.f32 %v49
    %vm56 = vmor %vm54, %vm55
    %v57 = vsel %vm56, %v49, %v53
    %v58 = vand.u32 2147483647, %v48
    %vm59 = vcmp.eq.f32.partialorder %v58, 8.507059e+37
    %v60 = vand.u32 %v48, 2147483648
    %v61 = vor.u32 1.1754944e-38, %v60
    %v62 = vsel %vm59, %v61, %v57
    %v63 = vmul.f32 %v38, %v62
    %v64 = vmin.f32 %v63, 1.0
    %v65 = vmax.f32 %v64, -1.0
    %v66 = vadd.f32 %v65, 1.0
    %v67 = vmul.f32 %v24, %v66
    %v68 = vlaneseq
    %vm69 = vcmp.ge.s32.totalorder %v68, 0
    %vm70 = vcmp.lt.s32.totalorder %v68, 512
    %vm71 = vmand %vm69, %vm70
    %72 = vst.msk [vmem:[#allocation5] sm:$0xf] %vm71, %v67
    // Predicated region
    $region10: #{tpu_custom_call.1} parent=1 // pred_check
      _
    $region11: #{tpu_custom_call.1} parent=1 // pred_check_branch
      %74 = sbr.rel (0) target = $region13
    $region12: #{tpu_custom_call.1} parent=1 // pred_region
      %76 = vsyncadd [#allocation4], 0
      %s78 = sshll.u32 [#allocation5], 4
      %s79 = int_to_ptr.vmem [resolvable:$true] %s78
      %s80 = sshll.u32 %s1, 4
      %s81 = int_to_ptr.hbm [resolvable:$true] %s80
      %83 = dma.vmem_to_hbm [thread:$0]  %s79, 64, %s81, [#allocation4]
    $region13: #{tpu_custom_call.1} parent=1 // pred_fallthru
      _
    // Predicated region
    $region14: #{tpu_custom_call.1} parent=1 // pred_check
      _
    $region15: #{tpu_custom_call.1} parent=1 // pred_check_branch
      %85 = sbr.rel (0) target = $region17
    $region16: #{tpu_custom_call.1} parent=1 // pred_region
      %87 = dma.done [#allocation4], 64
    $region17: #{tpu_custom_call.1} parent=1 // pred_fallthru
      _
    %88 = vsyncpa [#allocation3], 1
    %89 = vsyncpa [#allocation4], 1

</llo_original>
